<compile_context>
chip_gen: v7x
topology: tpu7x:2x2x1
jax: 0.10.0
libtpu: 0.0.40
codegen_flags: <defaults>
</compile_context>

<pallas_src>
import functools
import math

import jax
import jax.numpy as jnp
from jax.experimental import pallas as pl
from jax.experimental.pallas import tpu as pltpu


_MIB = 1024 * 1024
_MAX_PACKED_LANES = 256      # cap on k*C for the lane-packing MXU segment-sum variant


@functools.lru_cache(maxsize=None)
def _tpu_config():
    """Per-generation tuning: scoped VMEM limit, per-buffer budget, pipeline depth, min grid steps."""
    vmem_cap = None
    try:
        vmem_cap = getattr(pltpu.get_tpu_info(), "vmem_capacity_bytes", None)
    except Exception:
        vmem_cap = None
    if vmem_cap is not None and vmem_cap >= 100 * _MIB:
        # v5e / v6e: 128 MiB physical VMEM, 1 TensorCore -> big tiles, 2-deep pipeline.
        return dict(vmem_limit=96 * _MIB, buf_bytes=8 * _MIB, buffers=2, min_steps=2)
    if vmem_cap is not None:
        # v7x-class: 64 MiB VMEM, 3.2 TB/s HBM, 2 TensorCores -> smaller tiles,
        # deeper pipelining, and a guaranteed multi-step parallel grid.
        return dict(vmem_limit=48 * _MIB, buf_bytes=4 * _MIB, buffers=3, min_steps=4)
    # Unknown chip: conservative settings that are safe everywhere.
    return dict(vmem_limit=32 * _MIB, buf_bytes=4 * _MIB, buffers=2, min_steps=2)


def _cdiv(a, b):
    return -(-a // b)


def _sublane_align(itemsize):
    # Sub-32-bit dtypes pack along sublanes: 8 rows (f32), 16 (bf16), 32 (int8/fp8).
    return 8 * max(1, 4 // max(1, itemsize))


def _pick_tile(full, fp32_bytes_per_unit, buf_bytes, align, min_steps):
    """Largest align-multiple tile fitting the per-buffer budget, capped so the grid
    keeps >= min_steps steps (pipelining / v7x megacore) when the extent allows it."""
    if full <= align:
        return full
    budget = max(1, buf_bytes // max(1, fp32_bytes_per_unit))
    cap = _cdiv(full, max(1, min_steps))
    t = min(budget, cap)
    if t >= full:
        return full
    return max(align, (t // align) * align)


def _data_spec(block_shape, index_map, buffers):
    """BlockSpec for the streamed data arrays, with deeper multi-buffering on v7x."""
    buffered = getattr(pl, "Buffered", None)
    if buffers > 2 and buffered is not None:
        try:
            return pl.BlockSpec(block_shape, index_map, pipeline_mode=buffered(buffers))
        except TypeError:   # older jax without the pipeline_mode kwarg
            pass
    return pl.BlockSpec(block_shape, index_map)


def _choose_pack_factor(rows, C):
    """Smallest k with (k*C) % 128 == 0, rows % k == 0 and k*C <= cap; 1 = no packing."""
    if C % 128 == 0:
        return 1
    k = 128 // math.gcd(C, 128)
    if k * C <= _MAX_PACKED_LANES and rows % k == 0 and rows >= k:
        return k
    return 1


# ----------------------------------------------------------------------------
# channels_last, unpacked: normalize over the last (lane) axis of a (rows, C) slab.
# ----------------------------------------------------------------------------
def _ln_lanes_kernel(x_ref, w_ref, b_ref, o_ref, *, eps, inv_c):
    # x_ref: (TM, C)   w_ref/b_ref: (1, C) fp32   o_ref: (TM, C)
    x = x_ref[...].astype(jnp.float32)
    mean = jnp.sum(x, axis=-1, keepdims=True) * inv_c
    d = x - mean
    var = jnp.maximum(jnp.sum(d * d, axis=-1, keepdims=True) * inv_c, 0.0)
    inv = jax.lax.rsqrt(var + eps)
    o_ref[...] = (d * inv * w_ref[...] + b_ref[...]).astype(o_ref.dtype)


# ----------------------------------------------------------------------------
# channels_last, lane-packed: each tile row holds K original rows (K*C lanes, dense).
# Segment sums via a block-diagonal 0/1 matmul on the MXU (bf16 hi/lo split ~ f32).
# ----------------------------------------------------------------------------
def _seg_sum(v, ones_bf, *, split):
    hi = v.astype(jnp.bfloat16)
    s = jnp.dot(hi, ones_bf, preferred_element_type=jnp.float32)
    if split:   # keep ~f32 accuracy: the 0/1 matrix is exact in bf16, so hi+lo recovers v
        lo = (v - hi.astype(jnp.float32)).astype(jnp.bfloat16)
        s = s + jnp.dot(lo, ones_bf, preferred_element_type=jnp.float32)
    return s


def _ln_packed_kernel(x_ref, ones_ref, w_ref, b_ref, o_ref, *, eps, inv_c, split):
    # x_ref: (TM, K*C)  ones_ref: (K*C, K*C) block-diag 0/1 bf16
    # w_ref/b_ref: (1, K*C) fp32 (weight/bias tiled K times)   o_ref: (TM, K*C)
    x = x_ref[...].astype(jnp.float32)
    ones_bf = ones_ref[...]
    mean = _seg_sum(x, ones_bf, split=split) * inv_c
    d = x - mean
    var = jnp.maximum(_seg_sum(d * d, ones_bf, split=split) * inv_c, 0.0)
    inv = jax.lax.rsqrt(var + eps)
    o_ref[...] = (d * inv * w_ref[...] + b_ref[...]).astype(o_ref.dtype)


# ----------------------------------------------------------------------------
# channels_first: normalize over the sublane (C) axis of (TN, C, TL) blocks.
# ----------------------------------------------------------------------------
def _ln_sublanes_kernel(x_ref, w_ref, b_ref, o_ref, *, eps, inv_c):
    # x_ref: (TN, C, TL)   w_ref/b_ref: (1, C, 1) fp32   o_ref: (TN, C, TL)
    x = x_ref[...].astype(jnp.float32)
    mean = jnp.sum(x, axis=1, keepdims=True) * inv_c
    d = x - mean
    var = jnp.maximum(jnp.sum(d * d, axis=1, keepdims=True) * inv_c, 0.0)
    inv = jax.lax.rsqrt(var + eps)
    o_ref[...] = (d * inv * w_ref[...] + b_ref[...]).astype(o_ref.dtype)


# ----------------------------------------------------------------------------
# Wrappers.
# ----------------------------------------------------------------------------
def _layernorm_channels_last_2d(x2d, weight, bias, eps, *, tile_rows_override=None):
    rows, C = x2d.shape
    cfg = _tpu_config()
    itemsize = jnp.dtype(x2d.dtype).itemsize
    sub_align = _sublane_align(itemsize)
    w32 = weight.astype(jnp.float32)
    b32 = bias.astype(jnp.float32)

    k = _choose_pack_factor(rows, C)
    if k > 1:
        kc = k * C
        prows = rows // k
        xp = x2d.reshape(prows, kc)               # free reshape: k rows -> 1 lane-dense row
        wp = jnp.tile(w32, k).reshape(1, kc)
        bp = jnp.tile(b32, k).reshape(1, kc)
        seg = jnp.arange(kc, dtype=jnp.int32) // C
        ones_blkdiag = (seg[:, None] == seg[None, :]).astype(jnp.bfloat16)
        tile_rows = (tile_rows_override if tile_rows_override is not None else
                     _pick_tile(prows, kc * 4, cfg["buf_bytes"], sub_align, cfg["min_steps"]))
        grid = (_cdiv(prows, tile_rows),)
        kern = functools.partial(_ln_packed_kernel, eps=eps, inv_c=1.0 / C,
                                 split=bool(x2d.dtype == jnp.float32))
        yp = pl.pallas_call(
            kern,
            out_shape=jax.ShapeDtypeStruct((prows, kc), x2d.dtype),
            grid_spec=pltpu.PrefetchScalarGridSpec(
                num_scalar_prefetch=0,
                grid=grid,
                in_specs=[
                    _data_spec((tile_rows, kc), lambda i: (i, 0), cfg["buffers"]),
                    pl.BlockSpec((kc, kc), lambda i: (0, 0)),
                    pl.BlockSpec((1, kc), lambda i: (0, 0)),
                    pl.BlockSpec((1, kc), lambda i: (0, 0)),
                ],
                out_specs=_data_spec((tile_rows, kc), lambda i: (i, 0), cfg["buffers"]),
            ),
            compiler_params=pltpu.CompilerParams(
                dimension_semantics=("parallel",),
                vmem_limit_bytes=cfg["vmem_limit"]),
            cost_estimate=pl.CostEstimate(
                flops=(10 + 8 * kc) * rows * C,
                transcendentals=rows,
                bytes_accessed=2 * rows * C * itemsize),
        )(xp, ones_blkdiag, wp, bp)
        return yp.reshape(rows, C)

    # Unpacked path: C is already lane-dense (multiple of 128) or not packable.
    tile_rows = (tile_rows_override if tile_rows_override is not None else
                 _pick_tile(rows, C * 4, cfg["buf_bytes"], sub_align, cfg["min_steps"]))
    grid = (_cdiv(rows, tile_rows),)
    return pl.pallas_call(
        functools.partial(_ln_lanes_kernel, eps=eps, inv_c=1.0 / C),
        out_shape=jax.ShapeDtypeStruct((rows, C), x2d.dtype),
        grid_spec=pltpu.PrefetchScalarGridSpec(
            num_scalar_prefetch=0,
            grid=grid,
            in_specs=[
                _data_spec((tile_rows, C), lambda i: (i, 0), cfg["buffers"]),
                pl.BlockSpec((1, C), lambda i: (0, 0)),
                pl.BlockSpec((1, C), lambda i: (0, 0)),
            ],
            out_specs=_data_spec((tile_rows, C), lambda i: (i, 0), cfg["buffers"]),
        ),
        compiler_params=pltpu.CompilerParams(
            dimension_semantics=("parallel",),
            vmem_limit_bytes=cfg["vmem_limit"]),
        cost_estimate=pl.CostEstimate(
            flops=10 * rows * C,
            transcendentals=rows,
            bytes_accessed=2 * rows * C * itemsize),
    )(x2d, w32.reshape(1, C), b32.reshape(1, C))


def _layernorm_channels_first(x, weight, bias, eps, *, tile_l_override=None,
                              tile_n_override=None):
    N, C, H, W = x.shape
    L = H * W
    cfg = _tpu_config()
    x3 = x.reshape(N, C, L)                       # contiguous reshape: no data movement
    itemsize = jnp.dtype(x.dtype).itemsize
    w32 = weight.astype(jnp.float32).reshape(1, C, 1)
    b32 = bias.astype(jnp.float32).reshape(1, C, 1)

    # Lane tile: multiple of 128, or the full L.
    if tile_l_override is not None:
        tile_l = tile_l_override
    else:
        tile_l = _pick_tile(L, C * 4, cfg["buf_bytes"], 128, 1)

    # Batch tile: pack several images per step when L is small (late ConvNeXt stages)
    # to amortize the per-grid-step overhead; shrink again if the grid ends up with
    # too few steps for pipelining / the v7x megacore.
    if tile_n_override is not None:
        tile_n = tile_n_override
    else:
        tile_n = max(1, min(N, cfg["buf_bytes"] // max(1, C * tile_l * 4)))
        while tile_n > 1 and _cdiv(N, tile_n) * _cdiv(L, tile_l) < cfg["min_steps"]:
            tile_n = max(1, tile_n // 2)

    grid = (_cdiv(N, tile_n), _cdiv(L, tile_l))
    y3 = pl.pallas_call(
        functools.partial(_ln_sublanes_kernel, eps=eps, inv_c=1.0 / C),
        out_shape=jax.ShapeDtypeStruct((N, C, L), x.dtype),
        grid_spec=pltpu.PrefetchScalarGridSpec(
            num_scalar_prefetch=0,
            grid=grid,
            in_specs=[
                _data_spec((tile_n, C, tile_l), lambda n, l: (n, 0, l), cfg["buffers"]),
                pl.BlockSpec((1, C, 1), lambda n, l: (0, 0, 0)),
                pl.BlockSpec((1, C, 1), lambda n, l: (0, 0, 0)),
            ],
            out_specs=_data_spec((tile_n, C, tile_l), lambda n, l: (n, 0, l), cfg["buffers"]),
        ),
        compiler_params=pltpu.CompilerParams(
            dimension_semantics=("parallel", "parallel"),
            vmem_limit_bytes=cfg["vmem_limit"]),
        cost_estimate=pl.CostEstimate(
            flops=10 * N * C * L,
            transcendentals=N * L,
            bytes_accessed=2 * N * C * L * itemsize),
    )(x3, w32, b32)
    return y3.reshape(N, C, H, W)


# ----------------------------------------------------------------------------
# Module wrapper mirroring model/convnext.py LayerNorm.
# ----------------------------------------------------------------------------
class LayerNormPallas:
    """Mirrors ConvNeXt LayerNorm (eps=1e-6, channels_last / channels_first)."""

    def __init__(self, normalized_shape, eps=1e-6, data_format="channels_last"):
        if data_format not in ("channels_last", "channels_first"):
            raise NotImplementedError
        self.C = int(normalized_shape)
        self.eps = float(eps)
        self.data_format = data_format
        # Deterministic init, same as nn.Module __init__ (ones / zeros).
        self.weight = jnp.ones((self.C,), dtype=jnp.float32)
        self.bias = jnp.zeros((self.C,), dtype=jnp.float32)

    def __call__(self, x):
        if self.data_format == "channels_last":
            lead = x.shape[:-1]
            assert x.shape[-1] == self.C
            y2d = _layernorm_channels_last_2d(
                x.reshape(-1, self.C), self.weight, self.bias, self.eps)
            return y2d.reshape(*lead, self.C)
        else:
            assert x.shape[1] == self.C
            return _layernorm_channels_first(x, self.weight, self.bias, self.eps)


# ----------------------------------------------------------------------------
# Pure-JAX references (match the PyTorch module semantics).
# ----------------------------------------------------------------------------
def _ref_channels_first(x, weight, bias, eps):
    u = jnp.mean(x, axis=1, keepdims=True)
    s = jnp.mean((x - u) ** 2, axis=1, keepdims=True)
    xn = (x - u) / jnp.sqrt(s + eps)
    return weight[None, :, None, None] * xn + bias[None, :, None, None]


def _ref_channels_last(x, weight, bias, eps):
    u = jnp.mean(x, axis=-1, keepdims=True)
    s = jnp.mean((x - u) ** 2, axis=-1, keepdims=True)
    return (x - u) / jnp.sqrt(s + eps) * weight + bias


if __name__ == "__main__":
    key = jax.random.PRNGKey(0)
    k1, k2, k3, k4, k5, k6 = jax.random.split(key, 6)

    # channels_first path (ConvNeXt NCHW usage): x = (N, C, H, W)
    N, C, H, W = 2, 32, 8, 8
    x_cf = jax.random.normal(k1, (N, C, H, W), dtype=jnp.float32)
    ln_cf = LayerNormPallas(C, eps=1e-6, data_format="channels_first")
    y_cf = jax.block_until_ready(ln_cf(x_cf))
    ref_cf = _ref_channels_first(x_cf, ln_cf.weight, ln_cf.bias, ln_cf.eps)
    assert y_cf.shape == x_cf.shape
    assert jnp.allclose(y_cf, ref_cf, atol=1e-5, rtol=1e-5)

    # channels_last, C=32 -> lane-packed (k=4, 128 dense lanes) path.
    x_cl = jax.random.normal(k2, (N, H, W, C), dtype=jnp.float32)
    ln_cl = LayerNormPallas(C, eps=1e-6, data_format="channels_last")
    y_cl = jax.block_until_ready(ln_cl(x_cl))
    ref_cl = _ref_channels_last(x_cl, ln_cl.weight, ln_cl.bias, ln_cl.eps)
    assert y_cl.shape == x_cl.shape
    assert jnp.allclose(y_cl, ref_cl, atol=1e-5, rtol=1e-5)

    # channels_last, C=96 (ConvNeXt stem width): falls back to the unpacked kernel.
    C96 = 96
    x96 = jax.random.normal(k3, (2, 4, 4, C96), dtype=jnp.float32)
    ln96 = LayerNormPallas(C96, eps=1e-6, data_format="channels_last")
    y96 = jax.block_until_ready(ln96(x96))
    ref96 = _ref_channels_last(x96, ln96.weight, ln96.bias, ln96.eps)
    assert jnp.allclose(y96, ref96, atol=1e-5, rtol=1e-5)

    # Partial-last-block, packed path: 40 rows -> 10 packed rows, tile 8 -> grid 2.
    x_pad = jax.random.normal(k4, (2, 5, 4, C), dtype=jnp.float32)
    y_pad = jax.block_until_ready(
        _layernorm_channels_last_2d(
            x_pad.reshape(-1, C), ln_cl.weight, ln_cl.bias, ln_cl.eps,
            tile_rows_override=8).reshape(x_pad.shape))
    ref_pad = _ref_channels_last(x_pad, ln_cl.weight, ln_cl.bias, ln_cl.eps)
    assert jnp.allclose(y_pad, ref_pad, atol=1e-5, rtol=1e-5)

    # Partial-last-block, channels_first: L=144 with tile_l=128 -> partial lane block.
    x_pad_cf = jax.random.normal(k5, (1, C, 12, 12), dtype=jnp.float32)
    y_pad_cf = jax.block_until_ready(
        _layernorm_channels_first(
            x_pad_cf, ln_cf.weight, ln_cf.bias, ln_cf.eps, tile_l_override=128))
    ref_pad_cf = _ref_channels_first(x_pad_cf, ln_cf.weight, ln_cf.bias, ln_cf.eps)
    assert jnp.allclose(y_pad_cf, ref_pad_cf, atol=1e-5, rtol=1e-5)

    # bf16 input, channels_last packed path (dtype-aware sublane alignment, no hi/lo split).
    x_bf = jax.random.normal(k6, (2, 8, 8, C), dtype=jnp.float32).astype(jnp.bfloat16)
    y_bf = jax.block_until_ready(ln_cl(x_bf))
    ref_bf = _ref_channels_last(x_bf.astype(jnp.float32), ln_cl.weight, ln_cl.bias, ln_cl.eps)
    assert jnp.allclose(y_bf.astype(jnp.float32), ref_bf, atol=5e-2, rtol=5e-2)

    print("KERNEL_OK")
</pallas_src>

<mosaic_0001>
module attributes {stable_mosaic.version = 11 : i64} {
  func.func @_ln_sublanes_kernel(%arg0: i32, %arg1: i32, %arg2: memref<1x32x64xf32, #tpu.memory_space<vmem>>, %arg3: memref<1x32x1xf32, #tpu.memory_space<vmem>>, %arg4: memref<1x32x1xf32, #tpu.memory_space<vmem>>, %arg5: memref<1x32x64xf32, #tpu.memory_space<vmem>>) attributes {dimension_semantics = [#tpu.dimension_semantics<parallel>, #tpu.dimension_semantics<parallel>], iteration_bounds = array<i64: 2, 1>, scalar_prefetch = 0 : i64, scratch_operands = 0 : i64, tpu.core_type = #tpu.core_type<tc>, window_params = [{transform_indices = @transform_0, window_bounds = array<i64: 1, 32, 64>}, {pipeline_mode = #tpu.pipeline_mode<synchronous>, transform_indices = @transform_1, window_bounds = array<i64: 1, 32, 1>}, {pipeline_mode = #tpu.pipeline_mode<synchronous>, transform_indices = @transform_2, window_bounds = array<i64: 1, 32, 1>}, {transform_indices = @transform_3, window_bounds = array<i64: 1, 32, 64>}]} {
    %c0 = arith.constant 0 : index
    %c0_0 = arith.constant 0 : index
    %c0_1 = arith.constant 0 : index
    %0 = vector.load %arg2[%c0, %c0_0, %c0_1] : memref<1x32x64xf32, #tpu.memory_space<vmem>>, vector<1x32x64xf32>
    %cst = arith.constant dense<0.000000e+00> : vector<1x64xf32>
    %1 = vector.multi_reduction <add>, %0, %cst [1] : vector<1x32x64xf32> to vector<1x64xf32>
    %2 = vector.shape_cast %1 : vector<1x64xf32> to vector<1x1x64xf32>
    %cst_2 = arith.constant 3.125000e-02 : f32
    %3 = vector.broadcast %cst_2 : f32 to vector<1x1x64xf32>
    %4 = arith.mulf %2, %3 : vector<1x1x64xf32>
    %5 = vector.broadcast %4 : vector<1x1x64xf32> to vector<1x32x64xf32>
    %6 = arith.subf %0, %5 : vector<1x32x64xf32>
    %7 = arith.mulf %6, %6 : vector<1x32x64xf32>
    %cst_3 = arith.constant dense<0.000000e+00> : vector<1x64xf32>
    %8 = vector.multi_reduction <add>, %7, %cst_3 [1] : vector<1x32x64xf32> to vector<1x64xf32>
    %9 = vector.shape_cast %8 : vector<1x64xf32> to vector<1x1x64xf32>
    %cst_4 = arith.constant 3.125000e-02 : f32
    %10 = vector.broadcast %cst_4 : f32 to vector<1x1x64xf32>
    %11 = arith.mulf %9, %10 : vector<1x1x64xf32>
    %cst_5 = arith.constant 0.000000e+00 : f32
    %12 = vector.broadcast %cst_5 : f32 to vector<1x1x64xf32>
    %13 = arith.maximumf %11, %12 : vector<1x1x64xf32>
    %cst_6 = arith.constant 9.99999997E-7 : f32
    %14 = vector.broadcast %cst_6 : f32 to vector<1x1x64xf32>
    %15 = arith.addf %13, %14 : vector<1x1x64xf32>
    %16 = math.rsqrt %15 : vector<1x1x64xf32>
    %17 = vector.broadcast %16 : vector<1x1x64xf32> to vector<1x32x64xf32>
    %18 = arith.mulf %6, %17 : vector<1x32x64xf32>
    %c0_7 = arith.constant 0 : index
    %c0_8 = arith.constant 0 : index
    %c0_9 = arith.constant 0 : index
    %19 = vector.load %arg3[%c0_7, %c0_8, %c0_9] : memref<1x32x1xf32, #tpu.memory_space<vmem>>, vector<1x32x1xf32>
    %20 = vector.broadcast %19 : vector<1x32x1xf32> to vector<1x32x64xf32>
    %21 = arith.mulf %18, %20 : vector<1x32x64xf32>
    %c0_10 = arith.constant 0 : index
    %c0_11 = arith.constant 0 : index
    %c0_12 = arith.constant 0 : index
    %22 = vector.load %arg4[%c0_10, %c0_11, %c0_12] : memref<1x32x1xf32, #tpu.memory_space<vmem>>, vector<1x32x1xf32>
    %23 = vector.broadcast %22 : vector<1x32x1xf32> to vector<1x32x64xf32>
    %24 = arith.addf %21, %23 : vector<1x32x64xf32>
    %c0_13 = arith.constant 0 : index
    %c0_14 = arith.constant 0 : index
    %c0_15 = arith.constant 0 : index
    %25 = vector.load %arg5[%c0_13, %c0_14, %c0_15] : memref<1x32x64xf32, #tpu.memory_space<vmem>>, vector<1x32x64xf32>
    tpu.vector_store %arg5[%c0_13, %c0_14, %c0_15], %24 {strides = array<i32>} : memref<1x32x64xf32, #tpu.memory_space<vmem>>, vector<1x32x64xf32>,
    return
  }
  func.func @transform_0(%arg0: i32, %arg1: i32) -> (i32, i32, i32) {
    %c0_i32 = arith.constant 0 : i32
    %c0_i32_0 = arith.constant 0 : i32
    return %arg0, %c0_i32, %arg1 : i32, i32, i32
  }
  func.func @transform_1(%arg0: i32, %arg1: i32) -> (i32, i32, i32) {
    %c0_i32 = arith.constant 0 : i32
    %c0_i32_0 = arith.constant 0 : i32
    %c0_i32_1 = arith.constant 0 : i32
    %c0_i32_2 = arith.constant 0 : i32
    return %c0_i32, %c0_i32_0, %c0_i32_1 : i32, i32, i32
  }
  func.func @transform_2(%arg0: i32, %arg1: i32) -> (i32, i32, i32) {
    %c0_i32 = arith.constant 0 : i32
    %c0_i32_0 = arith.constant 0 : i32
    %c0_i32_1 = arith.constant 0 : i32
    %c0_i32_2 = arith.constant 0 : i32
    return %c0_i32, %c0_i32_0, %c0_i32_1 : i32, i32, i32
  }
  func.func @transform_3(%arg0: i32, %arg1: i32) -> (i32, i32, i32) {
    %c0_i32 = arith.constant 0 : i32
    %c0_i32_0 = arith.constant 0 : i32
    return %arg0, %c0_i32, %arg1 : i32, i32, i32
  }
}

</mosaic_0001>

<llo_original>
// kernel: tpu_custom_call.1
$region0: #{tpu_custom_call.1}
  #allocation0 [shape = 'u32[]', space=smem, size = 0x4, offset = 0x4, fixed_abs, tag = 'smem constant byte address 0x4 - core index']
  #allocation1 [shape = 'u32[144,128]{1,0:T(1,128)}', space=vmem, size = 0x12000, scoped, tag = 'internal scratch']
  %s0 = inlined_call_operand.vmem [shape: f32[2,32,64], index: 0, kind: input, shape index: {}]
  %s1 = inlined_call_operand.vmem [shape: f32[1,32,1], index: 1, kind: input, shape index: {}]
  %s2 = inlined_call_operand.vmem [shape: f32[1,32,1], index: 2, kind: input, shape index: {}]
  %s3 = inlined_call_operand.hbm [shape: f32[2,32,64], index: 3, kind: output, shape index: {}]
  %s4 = sld [smem:[#allocation0]]
  $region45: #{tpu_custom_call.1} parent=0
    _
  %s6 = ssub.s32 1, %s4
  %s7 = scalar_select 0, %s6, %s4
  $region1: #{tpu_custom_call.1} parent=0
    #allocation2 [shape = 'u8[32768]{0}', space=vmem, size = 0x8000, scoped, tag = 'output window, operand 0']
    #allocation3 [shape = 's32[2]{0}', space=sflag, size = 0x8, scoped, tag = 'scoped memory for tpu_custom_call.1']
    %8 = vsyncpa [#allocation3], 0
    %s9 = scalar_lea.sflag [#allocation3], 1
    %10 = vsyncpa %s9, 0
    loop: start=0, step=1, limit=4
    $region2: #{tpu_custom_call.1} parent=1 // loop_pre_header
      _
    $region3: #{tpu_custom_call.1} parent=1 // loop_header
      %s12 = sphi 0, %s16
      %p13 = scmp.ge.s32.totalorder %s12, 4
      %s19 = sphi 0, %s31
      %s20 = sphi 0, %s27
      %s21 = sphi 0, %s19
      %s22 = sphi 0, %s20
      %s23 = sphi 0, %s21
      %s24 = sphi 0, %s22
      %s36 = sphi 0, %s38
      %s39 = sphi 0, %s36
      %s40 = sphi 0, %s39
      %s56 = sphi 0, %s40
      %s60 = sphi 0, %s60
      %s62 = sphi 0, %s60
      %s63 = sphi 0, %s62
      %s77 = sphi 0, %s63
      %s81 = sphi 0, %s81
      %s83 = sphi 0, %s81
      %s84 = sphi 0, %s83
      %s98 = sphi 0, %s84
      %s106 = sphi 0, %s108
      %s109 = sphi 0, %s106
      %s110 = sphi 0, %s109
      %s126 = sphi 0, %s110
    $region4: #{tpu_custom_call.1} parent=1 // loop_header_branch
      %15 = sbr.rel (%p13) target = $region8
    $region5: #{tpu_custom_call.1} parent=1 // loop_body
      %s17 = ssub.s32 %s12, 1
      %s18 = ssub.s32 %s12, 2
      %s25 = sadd.s32 1, %s20
      %p26 = scmp.ge.s32.totalorder %s25, 1
      %s27 = scalar_select %p26, 0, %s25
      %s28 = sadd.s32 1, %s19
      %s29 = scalar_select %p26, %s28, %s19
      %p30 = scmp.ge.s32.totalorder %s29, 2
      %s31 = scalar_select %p30, 0, %s29
      %s32 = ssub.s32 %s19, %s31
      %s33 = ssub.s32 %s20, %s27
      %s34 = sor.u32 %s32, %s33
      %p35 = scmp.eq.s32.totalorder %s34, 0
      %s37 = sadd.s32 %s36, 1
      %s38 = scalar_select %p35, %s36, %s37
      %p41 = pneg %p35
      %p42 = scmp.eq.s32.totalorder %s12, 1
      %p43 = por %p41, %p42
      %p44 = scmp.ne.s32.totalorder %s36, %s39
      %p45 = scmp.eq.s32.totalorder %s12, 0
      %p46 = por %p44, %p45
      %p47 = scmp.ne.s32.totalorder %s36, %s39
      %p48 = scmp.eq.s32.totalorder %s17, 1
      %p49 = por %p47, %p48
      %p50 = scmp.ne.s32.totalorder %s39, %s40
      %p51 = scmp.eq.s32.totalorder %s17, 0
      %p52 = por %p50, %p51
      %p53 = scmp.ne.s32.totalorder %s39, %s40
      %p54 = scmp.eq.s32.totalorder %s18, 1
      %p55 = por %p53, %p54
      %p57 = scmp.ne.s32.totalorder %s40, %s56
      %p58 = scmp.eq.s32.totalorder %s18, 0
      %p59 = por %p57, %p58
      %s61 = sadd.s32 %s60, 1
      %p64 = scmp.eq.s32.totalorder %s12, 1
      %p65 = scmp.ne.s32.totalorder %s60, %s62
      %p66 = scmp.eq.s32.totalorder %s12, 0
      %p67 = por %p65, %p66
      %p68 = scmp.ne.s32.totalorder %s60, %s62
      %p69 = scmp.eq.s32.totalorder %s17, 1
      %p70 = por %p68, %p69
      %p71 = scmp.ne.s32.totalorder %s62, %s63
      %p72 = scmp.eq.s32.totalorder %s17, 0
      %p73 = por %p71, %p72
      %p74 = scmp.ne.s32.totalorder %s62, %s63
      %p75 = scmp.eq.s32.totalorder %s18, 1
      %p76 = por %p74, %p75
      %p78 = scmp.ne.s32.totalorder %s63, %s77
      %p79 = scmp.eq.s32.totalorder %s18, 0
      %p80 = por %p78, %p79
      %s82 = sadd.s32 %s81, 1
      %p85 = scmp.eq.s32.totalorder %s12, 1
      %p86 = scmp.ne.s32.totalorder %s81, %s83
      %p87 = scmp.eq.s32.totalorder %s12, 0
      %p88 = por %p86, %p87
      %p89 = scmp.ne.s32.totalorder %s81, %s83
      %p90 = scmp.eq.s32.totalorder %s17, 1
      %p91 = por %p89, %p90
      %p92 = scmp.ne.s32.totalorder %s83, %s84
      %p93 = scmp.eq.s32.totalorder %s17, 0
      %p94 = por %p92, %p93
      %p95 = scmp.ne.s32.totalorder %s83, %s84
      %p96 = scmp.eq.s32.totalorder %s18, 1
      %p97 = por %p95, %p96
      %p99 = scmp.ne.s32.totalorder %s84, %s98
      %p100 = scmp.eq.s32.totalorder %s18, 0
      %p101 = por %p99, %p100
      %s102 = ssub.s32 %s19, %s31
      %s103 = ssub.s32 %s20, %s27
      %s104 = sor.u32 %s102, %s103
      %p105 = scmp.eq.s32.totalorder %s104, 0
      %s107 = sadd.s32 %s106, 1
      %s108 = scalar_select %p105, %s106, %s107
      %p111 = pneg %p105
      %p112 = scmp.eq.s32.totalorder %s12, 1
      %p113 = por %p111, %p112
      %p114 = scmp.ne.s32.totalorder %s106, %s109
      %p115 = scmp.eq.s32.totalorder %s12, 0
      %p116 = por %p114, %p115
      %p117 = scmp.ne.s32.totalorder %s106, %s109
      %p118 = scmp.eq.s32.totalorder %s17, 1
      %p119 = por %p117, %p118
      %p120 = scmp.ne.s32.totalorder %s109, %s110
      %p121 = scmp.eq.s32.totalorder %s17, 0
      %p122 = por %p120, %p121
      %p123 = scmp.ne.s32.totalorder %s109, %s110
      %p124 = scmp.eq.s32.totalorder %s18, 1
      %p125 = por %p123, %p124
      %p127 = scmp.ne.s32.totalorder %s110, %s126
      %p128 = scmp.eq.s32.totalorder %s18, 0
      %p129 = por %p127, %p128
      %p130 = scmp.le.s32.totalorder 1, %s12
      %p131 = scmp.lt.s32.totalorder %s12, 3
      %p132 = pnand %p130, %p131
      %p133 = pneg %p132
      // Predicated region
      $region9: #{tpu_custom_call.1} parent=5 // pred_check
        _
      $region10: #{tpu_custom_call.1} parent=5 // pred_check_branch
        %135 = sbr.rel (%p132) target = $region12
      $region11: #{tpu_custom_call.1} parent=5 // pred_region
        %s136 = ssub.s32 %s12, 1
        // Predicated region
        $region13: #{tpu_custom_call.1} parent=11 // pred_check
          %p137 = pneg %p73
        $region14: #{tpu_custom_call.1} parent=11 // pred_check_branch
          %139 = sbr.rel (%p137) target = $region16
        $region15: #{tpu_custom_call.1} parent=11 // pred_region
          _
        $region16: #{tpu_custom_call.1} parent=11 // pred_fallthru
          _
        // Predicated region
        $region17: #{tpu_custom_call.1} parent=11 // pred_check
          %p140 = pneg %p94
        $region18: #{tpu_custom_call.1} parent=11 // pred_check_branch
          %142 = sbr.rel (%p140) target = $region20
        $region19: #{tpu_custom_call.1} parent=11 // pred_region
          _
        $region20: #{tpu_custom_call.1} parent=11 // pred_fallthru
          _
      $region12: #{tpu_custom_call.1} parent=5 // pred_fallthru
        _
      %p143 = scmp.lt.s32.totalorder %s12, 2
      // Predicated region
      $region21: #{tpu_custom_call.1} parent=5 // pred_check
        %p144 = pneg %p143
      $region22: #{tpu_custom_call.1} parent=5 // pred_check_branch
        %146 = sbr.rel (%p144) target = $region24
      $region23: #{tpu_custom_call.1} parent=5 // pred_region
        // Predicated region
        $region25: #{tpu_custom_call.1} parent=23 // pred_check
          %p147 = pneg %p46
        $region26: #{tpu_custom_call.1} parent=23 // pred_check_branch
          %149 = sbr.rel (%p147) target = $region28
        $region27: #{tpu_custom_call.1} parent=23 // pred_region
          %p150 = scmp.lt.s32.totalorder %s19, 1
          %s151 = scalar_select %p150, %s19, 1
          %p152 = scmp.lt.s32.totalorder %s20, 0
          %s153 = scalar_select %p152, %s20, 0
          %s154 = smul.addr %s151, 4
          %s155 = sadd.s32 %s153, %s154
          %s156 = smul.addr %s155, 8
          %s157 = scalar_lea.vmem %s0, %s156
        $region28: #{tpu_custom_call.1} parent=23 // pred_fallthru
          _
      $region24: #{tpu_custom_call.1} parent=5 // pred_fallthru
        _
      %p158 = scmp.le.s32.totalorder 1, %s12
      %p159 = scmp.lt.s32.totalorder %s12, 3
      %p160 = pnand %p158, %p159
      %p161 = pneg %p160
      // Predicated region
      $region29: #{tpu_custom_call.1} parent=5 // pred_check
        _
      $region30: #{tpu_custom_call.1} parent=5 // pred_check_branch
        %163 = sbr.rel (%p160) target = $region32
      $region31: #{tpu_custom_call.1} parent=5 // pred_region
        %s164 = ssub.s32 %s12, 1
        %p165 = scmp.lt.s32.totalorder %s21, 1
        %s166 = scalar_select %p165, %s21, 1
        %p167 = scmp.lt.s32.totalorder %s22, 0
        %s168 = scalar_select %p167, %s22, 0
        %s169 = smul.addr %s166, 4
        %s170 = sadd.s32 %s168, %s169
        %s171 = smul.addr %s170, 8
        %s172 = scalar_lea.vmem %s0, %s171
        %p173 = pneg %p52
        %p174 = pneg %p49
        %p175 = pneg %p73
        %p176 = pneg %p70
        %p177 = pneg %p94
        %p178 = pneg %p91
        %p179 = pneg %p122
        %p180 = pneg %p119
        %s181 = sand.u32 %s109, 1
        %s182 = scalar_lea.sflag [#allocation3], %s181
        %s183 = sand.u32 %s109, 1
        %s184 = smul.addr %s183, 32
        %s185 = scalar_lea.vmem [#allocation2], %s184
        %p186 = scmp.lt.s32.totalorder %s21, 1
        %s187 = scalar_select %p186, %s21, 1
        %p188 = scmp.lt.s32.totalorder %s22, 0
        %s189 = scalar_select %p188, %s22, 0
        %s190 = smul.addr %s187, 4
        %s191 = sadd.s32 %s189, %s190
        %s192 = smul.addr %s191, 8
        %s193 = scalar_lea.vmem %s0, %s192
        %v194 = vld [vmem:[%s193] sm:$0xff]
        %v195 = vld [vmem:[%s193 + $0x8] sm:$0xff]
        %v196 = vld [vmem:[%s193 + $0x10] sm:$0xff]
        %v197 = vld [vmem:[%s193 + $0x18] sm:$0xff]
        %vm198 = vcmask 523264
        %v199 = vsel %vm198, %v194, 0.0
        %v200 = vsel %vm198, %v195, 0.0
        %v201 = vadd.f32 %v199, %v200
        %v202 = vsel %vm198, %v196, 0.0
        %v203 = vadd.f32 %v201, %v202
        %v204 = vsel %vm198, %v197, 0.0
        %v205 = vadd.f32 %v203, %v204
        %v206 = vrot.slane %v205, 4
        %v207 = vadd.f32 %v205, %v206
        %v208 = vrot.slane %v207, 2
        %v209 = vadd.f32 %v207, %v208
        %v210 = vrot.slane %v209, 1
        %v211 = vadd.f32 %v209, %v210
        %v212 = vmul.f32 %v211, 0.03125
        %v213 = vsub.f32 %v194, %v212
        %v214 = vsub.f32 %v195, %v212
        %v215 = vsub.f32 %v196, %v212
        %v216 = vsub.f32 %v197, %v212
        %v217 = vmul.f32 %v213, %v213
        %v218 = vmul.f32 %v214, %v214
        %v219 = vmul.f32 %v215, %v215
        %v220 = vmul.f32 %v216, %v216
        %v221 = vsel %vm198, %v217, 0.0
        %v222 = vsel %vm198, %v218, 0.0
        %v223 = vadd.f32 %v221, %v222
        %v224 = vsel %vm198, %v219, 0.0
        %v225 = vadd.f32 %v223, %v224
        %v226 = vsel %vm198, %v220, 0.0
        %v227 = vadd.f32 %v225, %v226
        %v228 = vrot.slane %v227, 4
        %v229 = vadd.f32 %v227, %v228
        %v230 = vrot.slane %v229, 2
        %v231 = vadd.f32 %v229, %v230
        %v232 = vrot.slane %v231, 1
        %v233 = vadd.f32 %v231, %v232
        %v234 = vmul.f32 %v233, 0.03125
        %v235 = vmax.f32 %v234, 0.0
        %v236 = vadd.f32 %v235, 1e-06
        %v237 = vrsqrt.pop %v236
        %v238 = vmul.f32 %v213, %v237
        %v239 = vmul.f32 %v214, %v237
        %v240 = vmul.f32 %v215, %v237
        %v241 = vmul.f32 %v216, %v237
        %v242 = vld [vmem:[%s1] sm:$0xff]
        %v243 = vld [vmem:[%s1 + $0x8] sm:$0xff]
        %v244 = vld [vmem:[%s1 + $0x10] sm:$0xff]
        %v245 = vld [vmem:[%s1 + $0x18] sm:$0xff]
        %247 = vset.pattern.permute.xlu0 0
        %248 = vperm.xlu0 %247, %v242
        %v249 = vpop.permute.xlu0 %248
        %252 = vset.pattern.permute.xlu0 0
        %253 = vperm.xlu0 %252, %v243
        %v254 = vpop.permute.xlu0 %253
        %257 = vset.pattern.permute.xlu0 0
        %258 = vperm.xlu0 %257, %v244
        %v259 = vpop.permute.xlu0 %258
        %262 = vset.pattern.permute.xlu0 0
        %263 = vperm.xlu0 %262, %v245
        %v264 = vpop.permute.xlu0 %263
        %v266 = vmul.f32 %v238, %v249
        %v267 = vmul.f32 %v239, %v254
        %v268 = vmul.f32 %v240, %v259
        %v269 = vmul.f32 %v241, %v264
        %v270 = vld [vmem:[%s2] sm:$0xff]
        %v271 = vld [vmem:[%s2 + $0x8] sm:$0xff]
        %v272 = vld [vmem:[%s2 + $0x10] sm:$0xff]
        %v273 = vld [vmem:[%s2 + $0x18] sm:$0xff]
        %275 = vset.pattern.permute.xlu0 0
        %276 = vperm.xlu0 %275, %v270
        %v277 = vpop.permute.xlu0 %276
        %280 = vset.pattern.permute.xlu0 0
        %281 = vperm.xlu0 %280, %v271
        %v282 = vpop.permute.xlu0 %281
        %285 = vset.pattern.permute.xlu0 0
        %286 = vperm.xlu0 %285, %v272
        %v287 = vpop.permute.xlu0 %286
        %290 = vset.pattern.permute.xlu0 0
        %291 = vperm.xlu0 %290, %v273
        %v292 = vpop.permute.xlu0 %291
        %v294 = vadd.f32 %v266, %v277
        %v295 = vadd.f32 %v267, %v282
        %v296 = vadd.f32 %v268, %v287
        %v297 = vadd.f32 %v269, %v292
        %298 = vst.msk [vmem:[%s185] sm:$0xff] %vm198, %v294
        %299 = vst.msk [vmem:[%s185 + $0x8] sm:$0xff] %vm198, %v295
        %300 = vst.msk [vmem:[%s185 + $0x10] sm:$0xff] %vm198, %v296
        %301 = vst.msk [vmem:[%s185 + $0x18] sm:$0xff] %vm198, %v297
        %s302 = sand.u32 %s109, 1
        %s303 = scalar_lea.sflag [#allocation3], %s302
        %s304 = sand.u32 %s109, 1
        %s305 = smul.addr %s304, 32
        %s306 = scalar_lea.vmem [#allocation2], %s305
        // Predicated region
        $region33: #{tpu_custom_call.1} parent=31 // pred_check
          %p307 = pneg %p119
        $region34: #{tpu_custom_call.1} parent=31 // pred_check_branch
          %309 = sbr.rel (%p307) target = $region36
        $region35: #{tpu_custom_call.1} parent=31 // pred_region
          %s311 = ssub.s32 512, 512
          %312 = vsyncadd %s303, %s311
          %s313 = smul.addr %s21, 4
          %s314 = sadd.s32 %s22, %s313
          %s315 = smul.addr %s314, 128
          %s316 = scalar_lea.hbm %s3, %s315
          %s317 = sshll.u32 %s306, 4
          %s318 = int_to_ptr.vmem [resolvable:$true] %s317
          %323 = dma.vmem_to_hbm [thread:$0]  %s318, 512, %s316, %s303, 128, 128, 8
        $region36: #{tpu_custom_call.1} parent=31 // pred_fallthru
          _
      $region32: #{tpu_custom_call.1} parent=5 // pred_fallthru
        _
      %p324 = scmp.le.s32.totalorder 2, %s12
      // Predicated region
      $region37: #{tpu_custom_call.1} parent=5 // pred_check
        %p325 = pneg %p324
      $region38: #{tpu_custom_call.1} parent=5 // pred_check_branch
        %327 = sbr.rel (%p325) target = $region40
      $region39: #{tpu_custom_call.1} parent=5 // pred_region
        %s328 = ssub.s32 %s12, 2
        // Predicated region
        $region41: #{tpu_custom_call.1} parent=39 // pred_check
          %p329 = pneg %p125
        $region42: #{tpu_custom_call.1} parent=39 // pred_check_branch
          %331 = sbr.rel (%p329) target = $region44
        $region43: #{tpu_custom_call.1} parent=39 // pred_region
          %s332 = sand.u32 %s110, 1
          %s333 = scalar_lea.sflag [#allocation3], %s332
          %s334 = sand.u32 %s110, 1
          %s335 = smul.addr %s334, 32
          %s336 = scalar_lea.vmem [#allocation2], %s335
          %337 = dma.done %s333, 512
        $region44: #{tpu_custom_call.1} parent=39 // pred_fallthru
          _
      $region40: #{tpu_custom_call.1} parent=5 // pred_fallthru
        _
    $region6: #{tpu_custom_call.1} parent=1 // loop_footer
      %s16 = sadd.s32 1, %s12
    $region7: #{tpu_custom_call.1} parent=1 // loop_footer_branch
      %11 = sbr.rel target = $region3
    $region8: #{tpu_custom_call.1} parent=1 // loop_exit
      _
    %338 = vsyncpa [#allocation3], 1
    %s339 = scalar_lea.sflag [#allocation3], 1
    %340 = vsyncpa %s339, 1

</llo_original>
